<compile_context>
chip_gen: v5e
topology: v5e:2x2
jax: 0.10.0
libtpu: 0.0.40
codegen_flags: <defaults>
</compile_context>

<pallas_src>
import math

import jax
import jax.numpy as jnp
from jax.experimental import pallas as pl
from jax.experimental.pallas import tpu as pltpu

_LANE = 128


def _round_up(a: int, b: int) -> int:
    return -(-a // b) * b


def _round_down(a: int, b: int) -> int:
    return (a // b) * b


def _sublane_count(dtype) -> int:
    # packed sublane count: 8 for 4-byte, 16 for 2-byte, 32 for 1-byte dtypes
    return max(8, 32 // jnp.dtype(dtype).itemsize)


def _device_kind() -> str:
    try:
        return jax.devices()[0].device_kind.lower()
    except Exception:
        return ""


def _vmem_capacity_bytes(default_bytes: int) -> int:
    try:
        return int(pltpu.get_tpu_info().vmem_capacity_bytes)
    except Exception:
        return default_bytes


def _rmsnorm_hidden_tiled(x2d, w2d, rows, hidden, eps, out_dtype, *,
                          br, hc, vmem_limit):
    """Two-pass path for very wide hidden: (1) per-row sum of squares over
    hidden chunks, (2) scale each chunk. Both kernels stream at HBM roofline."""
    inv_hidden = 1.0 / float(hidden)
    eps_f = float(eps)
    nh = pl.cdiv(hidden, hc)
    nr = pl.cdiv(rows, br)

    def ssq_kernel(x_ref, ssq_ref):
        j = pl.program_id(1)

        @pl.when(j == 0)
        def _():
            ssq_ref[...] = jnp.zeros_like(ssq_ref)

        xf = x_ref[...].astype(jnp.float32)
        # mask out-of-bounds lanes of the last (partial) hidden chunk
        col = j * hc + jax.lax.broadcasted_iota(jnp.int32, xf.shape, 1)
        xf = jnp.where(col < hidden, xf, 0.0)
        ssq_ref[...] += jnp.sum(xf * xf, axis=-1, keepdims=True)

    ssq = pl.pallas_call(
        ssq_kernel,
        out_shape=jax.ShapeDtypeStruct((rows, 1), jnp.float32),
        grid_spec=pltpu.PrefetchScalarGridSpec(
            num_scalar_prefetch=0,
            grid=(nr, nh),
            in_specs=[pl.BlockSpec((br, hc), lambda i, j: (i, j))],
            out_specs=pl.BlockSpec((br, 1), lambda i, j: (i, 0)),
        ),
        compiler_params=pltpu.CompilerParams(
            dimension_semantics=("parallel", "arbitrary"),
            vmem_limit_bytes=vmem_limit,
        ),
    )(x2d)

    def scale_kernel(x_ref, w_ref, ssq_ref, o_ref):
        xf = x_ref[...].astype(jnp.float32)
        inv = jax.lax.rsqrt(ssq_ref[...] * inv_hidden + eps_f)
        o_ref[...] = (xf * inv * w_ref[...].astype(jnp.float32)).astype(o_ref.dtype)

    out2d = pl.pallas_call(
        scale_kernel,
        out_shape=jax.ShapeDtypeStruct((rows, hidden), out_dtype),
        grid_spec=pltpu.PrefetchScalarGridSpec(
            num_scalar_prefetch=0,
            grid=(nr, nh),
            in_specs=[
                pl.BlockSpec((br, hc), lambda i, j: (i, j)),
                pl.BlockSpec((1, hc), lambda i, j: (0, j)),
                pl.BlockSpec((br, 1), lambda i, j: (i, 0)),
            ],
            out_specs=pl.BlockSpec((br, hc), lambda i, j: (i, j)),
        ),
        compiler_params=pltpu.CompilerParams(
            dimension_semantics=("parallel", "arbitrary"),
            vmem_limit_bytes=vmem_limit,
        ),
    )(x2d, w2d, ssq)
    return out2d


def rmsnorm(x: jax.Array, weight: jax.Array, eps: float = 1e-5,
            block_rows: int | None = None,
            hidden_block: int | None = None) -> jax.Array:
    """RMSNorm over the last axis of x, scaled by weight (shape [hidden])."""
    orig_shape = x.shape
    hidden = int(orig_shape[-1])
    rows = int(math.prod(orig_shape[:-1])) if len(orig_shape) > 1 else 1
    itemsize = jnp.dtype(x.dtype).itemsize
    sublane = _sublane_count(x.dtype)

    x2d = x.reshape(rows, hidden)
    w2d = weight.reshape(1, hidden)

    # --- per-generation parameters ------------------------------------------
    kind = _device_kind()
    is_v7 = "v7" in kind
    vmem_cap = _vmem_capacity_bytes((64 << 20) if is_v7 else (128 << 20))
    # leave headroom for compiler internal scratch; v7x has only 64 MiB / TC
    budget = min((48 << 20) if is_v7 else (100 << 20), (vmem_cap * 3) // 4)
    if is_v7:
        # 3.2 TB/s HBM -> bigger blocks to amortize ~0.35us per-step overhead;
        # keep smaller blocks for narrow dtypes (f32 upcast temp must fit).
        target_bytes = (8 << 20) if itemsize >= 4 else (5 << 20)
    else:
        target_bytes = 4 << 20

    # VMEM cost model per row of a block: double-buffered in + out blocks plus
    # the f32 upcast temporaries the kernel materializes.
    per_row_bytes = 4 * hidden * itemsize + 8 * hidden
    fixed_bytes = 2 * hidden * (itemsize + 4) + (2 << 20)
    br_cap = max(0, (budget - fixed_bytes) // max(1, per_row_bytes))
    br_cap = _round_down(br_cap, sublane)

    # --- pathologically wide hidden (or forced): two-pass hidden-tiled path --
    force_tiled = (hidden_block is not None
                   and _round_up(int(hidden_block), _LANE) < hidden)
    if force_tiled or br_cap < sublane:
        if hidden_block is not None:
            hc = max(_LANE, _round_up(int(hidden_block), _LANE))
        else:
            hc = max(_LANE, _round_down(
                max(_LANE, (budget - (2 << 20)) // (sublane * (4 * itemsize + 8))),
                _LANE))
        hc = min(hc, _round_up(hidden, _LANE))
        per_row_t = 4 * hc * itemsize + 8 * hc + 16
        brf = min(max(1, target_bytes // max(1, hc * itemsize)),
                  max(sublane, (budget - (2 << 20)) // per_row_t))
        brf = min(brf, _round_up(rows, sublane))
        brf = max(sublane, _round_down(brf, sublane))
        need = per_row_t * brf + 2 * hc * (itemsize + 4) + (2 << 20)
        vmem_limit = int(min(budget, max(need, 16 << 20)))
        out2d = _rmsnorm_hidden_tiled(x2d, w2d, rows, hidden, eps, x.dtype,
                                      br=brf, hc=hc, vmem_limit=vmem_limit)
        return out2d.reshape(orig_shape)

    # --- main path: choose block_rows (sublane-aligned) ----------------------
    if block_rows is None:
        br = max(sublane, target_bytes // max(1, hidden * itemsize))
    else:
        br = max(sublane, int(block_rows))
    br = min(br, br_cap, _round_up(rows, sublane))
    br = max(sublane, _round_down(br, sublane))

    # Megacore heuristic: only v7x has 2 TensorCores. Aim for an even number of
    # grid steps (>= 2 per core) so neither core gets a whole extra block.
    if is_v7 and rows * hidden * itemsize >= (8 << 20):
        ng = pl.cdiv(rows, br)
        if ng < 4 or (ng % 2 != 0):
            ng_target = max(4, ng + (ng % 2))
            br_even = _round_up(pl.cdiv(rows, ng_target), sublane)
            br = max(sublane, min(br, br_even))

    grid = (pl.cdiv(rows, br),)
    need = per_row_bytes * br + fixed_bytes
    vmem_limit = int(min(budget, max(need, 16 << 20)))

    # --- kernel: eps / 1/hidden are static Python constants ------------------
    inv_hidden = 1.0 / float(hidden)
    eps_f = float(eps)

    def kernel(x_ref, w_ref, o_ref):
        xf = x_ref[...].astype(jnp.float32)
        ms = jnp.sum(xf * xf, axis=-1, keepdims=True) * inv_hidden
        inv = jax.lax.rsqrt(ms + eps_f)
        o_ref[...] = (xf * inv * w_ref[...].astype(jnp.float32)).astype(o_ref.dtype)

    out2d = pl.pallas_call(
        kernel,
        out_shape=jax.ShapeDtypeStruct((rows, hidden), x.dtype),
        grid_spec=pltpu.PrefetchScalarGridSpec(
            num_scalar_prefetch=0,
            grid=grid,
            in_specs=[
                # last dim == full array dim -> no HBM padding needed
                pl.BlockSpec((br, hidden), lambda i: (i, 0)),
                pl.BlockSpec((1, hidden), lambda i: (0, 0)),
            ],
            out_specs=pl.BlockSpec((br, hidden), lambda i: (i, 0)),
        ),
        compiler_params=pltpu.CompilerParams(
            dimension_semantics=("parallel",),
            vmem_limit_bytes=vmem_limit,
        ),
    )(x2d, w2d)
    return out2d.reshape(orig_shape)


def rmsnorm_reference(x, weight, eps=1e-5):
    xf = x.astype(jnp.float32)
    norm_x = xf * jax.lax.rsqrt(jnp.mean(xf * xf, axis=-1, keepdims=True) + eps)
    return (norm_x * weight.astype(jnp.float32)).astype(x.dtype)


if __name__ == "__main__":
    key = jax.random.PRNGKey(0)

    # 1) Small shape matching the module's forward (normalize over last dim).
    batch, seq, hidden = 2, 8, 32
    x = jax.random.normal(key, (batch, seq, hidden), dtype=jnp.float32)
    weight = jnp.ones((hidden,), dtype=jnp.float32)   # nn.Parameter(torch.ones(hidden))

    out = jax.block_until_ready(rmsnorm(x, weight, eps=1e-5))
    ref = rmsnorm_reference(x, weight, eps=1e-5)
    assert out.shape == x.shape and out.dtype == x.dtype
    assert jnp.allclose(out, ref, atol=1e-5, rtol=1e-5), "mismatch vs reference"

    # 2) Odd row count, hidden not a multiple of 128, non-unit weight:
    #    exercises the padding-free partial-block path.
    k1, k2 = jax.random.split(key)
    x2 = jax.random.normal(k1, (3, 7, 200), dtype=jnp.float32)
    w2 = 1.0 + 0.1 * jax.random.normal(k2, (200,), dtype=jnp.float32)
    out2 = jax.block_until_ready(rmsnorm(x2, w2, eps=1e-5))
    ref2 = rmsnorm_reference(x2, w2, eps=1e-5)
    assert out2.shape == x2.shape and out2.dtype == x2.dtype
    assert jnp.allclose(out2, ref2, atol=1e-5, rtol=1e-5), "mismatch vs reference (partial)"

    # 3) Force the two-pass hidden-tiled fallback (used for very wide hidden)
    #    to verify it as well, including its partial-chunk masking.
    out3 = jax.block_until_ready(rmsnorm(x2, w2, eps=1e-5, hidden_block=128))
    assert out3.shape == x2.shape and out3.dtype == x2.dtype
    assert jnp.allclose(out3, ref2, atol=1e-5, rtol=1e-5), "mismatch vs reference (tiled)"

    print("KERNEL_OK")
</pallas_src>

<mosaic_0001>
module attributes {stable_mosaic.version = 11 : i64} {
  func.func @kernel(%arg0: i32, %arg1: memref<16x32xf32, #tpu.memory_space<vmem>>, %arg2: memref<1x32xf32, #tpu.memory_space<vmem>>, %arg3: memref<16x32xf32, #tpu.memory_space<vmem>>) attributes {dimension_semantics = [#tpu.dimension_semantics<parallel>], iteration_bounds = array<i64: 1>, scalar_prefetch = 0 : i64, scratch_operands = 0 : i64, tpu.core_type = #tpu.core_type<tc>, window_params = [{transform_indices = @transform_0, window_bounds = array<i64: 16, 32>}, {pipeline_mode = #tpu.pipeline_mode<synchronous>, transform_indices = @transform_1, window_bounds = array<i64: 1, 32>}, {transform_indices = @transform_2, window_bounds = array<i64: 16, 32>}]} {
    %c0 = arith.constant 0 : index
    %c0_0 = arith.constant 0 : index
    %0 = vector.load %arg1[%c0, %c0_0] : memref<16x32xf32, #tpu.memory_space<vmem>>, vector<16x32xf32>
    %1 = arith.mulf %0, %0 : vector<16x32xf32>
    %cst = arith.constant dense<0.000000e+00> : vector<16xf32>
    %2 = vector.multi_reduction <add>, %1, %cst [1] : vector<16x32xf32> to vector<16xf32>
    %3 = vector.shape_cast %2 : vector<16xf32> to vector<16x1xf32>
    %cst_1 = arith.constant 3.125000e-02 : f32
    %4 = vector.broadcast %cst_1 : f32 to vector<16x1xf32>
    %5 = arith.mulf %3, %4 : vector<16x1xf32>
    %cst_2 = arith.constant 9.99999974E-6 : f32
    %6 = vector.broadcast %cst_2 : f32 to vector<16x1xf32>
    %7 = arith.addf %5, %6 : vector<16x1xf32>
    %8 = math.rsqrt %7 : vector<16x1xf32>
    %9 = vector.broadcast %8 : vector<16x1xf32> to vector<16x32xf32>
    %10 = arith.mulf %0, %9 : vector<16x32xf32>
    %c0_3 = arith.constant 0 : index
    %c0_4 = arith.constant 0 : index
    %11 = vector.load %arg2[%c0_3, %c0_4] : memref<1x32xf32, #tpu.memory_space<vmem>>, vector<1x32xf32>
    %12 = vector.broadcast %11 : vector<1x32xf32> to vector<16x32xf32>
    %13 = arith.mulf %10, %12 : vector<16x32xf32>
    %c0_5 = arith.constant 0 : index
    %c0_6 = arith.constant 0 : index
    %14 = vector.load %arg3[%c0_5, %c0_6] : memref<16x32xf32, #tpu.memory_space<vmem>>, vector<16x32xf32>
    tpu.vector_store %arg3[%c0_5, %c0_6], %13 {strides = array<i32>} : memref<16x32xf32, #tpu.memory_space<vmem>>, vector<16x32xf32>,
    return
  }
  func.func @transform_0(%arg0: i32) -> (i32, i32) {
    %c0_i32 = arith.constant 0 : i32
    %c0_i32_0 = arith.constant 0 : i32
    return %arg0, %c0_i32 : i32, i32
  }
  func.func @transform_1(%arg0: i32) -> (i32, i32) {
    %c0_i32 = arith.constant 0 : i32
    %c0_i32_0 = arith.constant 0 : i32
    %c0_i32_1 = arith.constant 0 : i32
    return %c0_i32, %c0_i32_0 : i32, i32
  }
  func.func @transform_2(%arg0: i32) -> (i32, i32) {
    %c0_i32 = arith.constant 0 : i32
    %c0_i32_0 = arith.constant 0 : i32
    return %arg0, %c0_i32 : i32, i32
  }
}

</mosaic_0001>

<llo_original>
// kernel: tpu_custom_call.1
$region0: #{tpu_custom_call.1}
  #allocation0 [shape = 'u32[]', space=smem, size = 0x4, offset = 0x4, fixed_abs, tag = 'smem constant byte address 0x4 - core index']
  #allocation1 [shape = 'u32[72,128]{1,0:T(1,128)}', space=vmem, size = 0x9000, scoped, tag = 'internal scratch']
  %s0 = inlined_call_operand.hbm [shape: f32[16,32], index: 0, kind: input, shape index: {}]
  %s1 = inlined_call_operand.hbm [shape: f32[1,32], index: 1, kind: input, shape index: {}]
  %s2 = inlined_call_operand.hbm [shape: f32[16,32], index: 2, kind: output, shape index: {}]
  %s3 = sld [smem:[#allocation0]]
  $region26: #{tpu_custom_call.1} parent=0
    _
  %s5 = ssub.s32 1, %s3
  %s6 = scalar_select 0, %s5, %s3
  $region1: #{tpu_custom_call.1} parent=0
    #allocation2 [shape = 'u8[8192]{0}', space=vmem, size = 0x2000, scoped, tag = 'input window, operand 0, single buffered']
    #allocation3 [shape = 's32[1]{0}', space=sflag, size = 0x4, scoped, tag = 'scoped memory for tpu_custom_call.1']
    #allocation4 [shape = 's32[1]{0}', space=sflag, size = 0x4, scoped, tag = 'scoped memory for tpu_custom_call.1']
    #allocation5 [shape = 'u8[512]{0}', space=vmem, size = 0x400, scoped, tag = 'input window, operand 1, single buffered']
    #allocation6 [shape = 's32[1]{0}', space=sflag, size = 0x4, scoped, tag = 'scoped memory for tpu_custom_call.1']
    #allocation7 [shape = 'u8[8192]{0}', space=vmem, size = 0x2000, scoped, tag = 'output window, operand 0, single buffered']
    %7 = vsyncpa [#allocation3], 0
    %8 = vsyncpa [#allocation6], 0
    %9 = vsyncpa [#allocation4], 0
    // Predicated region
    $region2: #{tpu_custom_call.1} parent=1 // pred_check
      _
    $region3: #{tpu_custom_call.1} parent=1 // pred_check_branch
      %11 = sbr.rel (0) target = $region5
    $region4: #{tpu_custom_call.1} parent=1 // pred_region
      %13 = vsyncadd [#allocation3], 0
      %s14 = sshll.u32 %s0, 4
      %s15 = int_to_ptr.hbm [resolvable:$true] %s14
      %s16 = sshll.u32 [#allocation2], 4
      %s17 = int_to_ptr.vmem [resolvable:$true] %s16
      %22 = dma.hbm_to_vmem [thread:$0]  %s15, 256, %s17, [#allocation3], 128, 128, 8
    $region5: #{tpu_custom_call.1} parent=1 // pred_fallthru
      _
    // Predicated region
    $region6: #{tpu_custom_call.1} parent=1 // pred_check
      _
    $region7: #{tpu_custom_call.1} parent=1 // pred_check_branch
      %24 = sbr.rel (0) target = $region9
    $region8: #{tpu_custom_call.1} parent=1 // pred_region
      %26 = vsyncadd [#allocation6], 0
      %s28 = sshll.u32 %s1, 4
      %s29 = int_to_ptr.hbm [resolvable:$true] %s28
      %s30 = sshll.u32 [#allocation5], 4
      %s31 = int_to_ptr.vmem [resolvable:$true] %s30
      %33 = dma.hbm_to_vmem [thread:$0]  %s29, 16, %s31, [#allocation6]
    $region9: #{tpu_custom_call.1} parent=1 // pred_fallthru
      _
    // Predicated region
    $region10: #{tpu_custom_call.1} parent=1 // pred_check
      _
    $region11: #{tpu_custom_call.1} parent=1 // pred_check_branch
      %35 = sbr.rel (0) target = $region13
    $region12: #{tpu_custom_call.1} parent=1 // pred_region
      %37 = dma.done [#allocation3], 256
    $region13: #{tpu_custom_call.1} parent=1 // pred_fallthru
      _
    // Predicated region
    $region14: #{tpu_custom_call.1} parent=1 // pred_check
      _
    $region15: #{tpu_custom_call.1} parent=1 // pred_check_branch
      %39 = sbr.rel (0) target = $region17
    $region16: #{tpu_custom_call.1} parent=1 // pred_region
      %41 = dma.done [#allocation6], 16
    $region17: #{tpu_custom_call.1} parent=1 // pred_fallthru
      _
    %v42 = vld [vmem:[#allocation2] sm:$0xff]
    %v43 = vld [vmem:[#allocation2 + $0x8] sm:$0xff]
    %v44 = vmul.f32 %v42, %v42
    %v45 = vmul.f32 %v43, %v43
    %vm46 = vcmask 261120
    %v47 = vsel %vm46, %v44, 0.0
    %48 = vadd.xlane.f32.xlu0 %v47
    %v49 = vpop.xlane.xlu0 %48
    %v50 = vsel %vm46, %v45, 0.0
    %51 = vadd.xlane.f32.xlu0 %v50
    %v52 = vpop.xlane.xlu0 %51
    %v53 = vmul.f32 %v49, 0.03125
    %v54 = vmul.f32 %v52, 0.03125
    %v55 = vadd.f32 %v53, 1e-05
    %v56 = vadd.f32 %v54, 1e-05
    %v57 = vrsqrt.pop %v55
    %v58 = vmul.f32 %v57, %v55
    %v59 = vmul.f32 %v58, %v57
    %v60 = vmul.f32 0.5, %v59
    %v61 = vsub.f32 1.5, %v60
    %v62 = vmul.f32 %v57, %v61
    %vm63 = vweird.f32 %v55
    %vm64 = vweird.f32 %v57
    %vm65 = vmor %vm63, %vm64
    %v66 = vsel %vm65, %v57, %v62
    %v67 = vrsqrt.pop %v56
    %v68 = vmul.f32 %v67, %v56
    %v69 = vmul.f32 %v68, %v67
    %v70 = vmul.f32 0.5, %v69
    %v71 = vsub.f32 1.5, %v70
    %v72 = vmul.f32 %v67, %v71
    %vm73 = vweird.f32 %v56
    %vm74 = vweird.f32 %v67
    %vm75 = vmor %vm73, %vm74
    %v76 = vsel %vm75, %v67, %v72
    %v77 = vmul.f32 %v42, %v66
    %v78 = vmul.f32 %v43, %v76
    %v79 = vld [vmem:[#allocation5] sm:$0x1]
    %v81 = vperm.slane %v79, 0
    %v83 = vmul.f32 %v77, %v81
    %v84 = vmul.f32 %v78, %v81
    %85 = vst.msk [vmem:[#allocation7] sm:$0xff] %vm46, %v83
    %86 = vst.msk [vmem:[#allocation7 + $0x8] sm:$0xff] %vm46, %v84
    // Predicated region
    $region18: #{tpu_custom_call.1} parent=1 // pred_check
      _
    $region19: #{tpu_custom_call.1} parent=1 // pred_check_branch
      %88 = sbr.rel (0) target = $region21
    $region20: #{tpu_custom_call.1} parent=1 // pred_region
      %90 = vsyncadd [#allocation4], 0
      %s91 = sshll.u32 [#allocation7], 4
      %s92 = int_to_ptr.vmem [resolvable:$true] %s91
      %s93 = sshll.u32 %s2, 4
      %s94 = int_to_ptr.hbm [resolvable:$true] %s93
      %99 = dma.vmem_to_hbm [thread:$0]  %s92, 256, %s94, [#allocation4], 128, 128, 8
    $region21: #{tpu_custom_call.1} parent=1 // pred_fallthru
      _
    // Predicated region
    $region22: #{tpu_custom_call.1} parent=1 // pred_check
      _
    $region23: #{tpu_custom_call.1} parent=1 // pred_check_branch
      %101 = sbr.rel (0) target = $region25
    $region24: #{tpu_custom_call.1} parent=1 // pred_region
      %103 = dma.done [#allocation4], 256
    $region25: #{tpu_custom_call.1} parent=1 // pred_fallthru
      _
    %104 = vsyncpa [#allocation3], 1
    %105 = vsyncpa [#allocation6], 1
    %106 = vsyncpa [#allocation4], 1

</llo_original>
